<compile_context>
chip_gen: v6e
topology: v6e:2x2x1
jax: 0.10.0
libtpu: 0.0.40
codegen_flags: <defaults>
</compile_context>

<pallas_src>
import jax
import jax.numpy as jnp
from jax.experimental import pallas as pl
from jax.experimental.pallas import tpu as pltpu

BN_EPS = 1e-9


def asp_kernel(q_ref, ub_ref, w1q_ref, w1ub_ref, w1p_ref, b1_ref,
               alpha_ref, beta_ref, w23_ref, b23_ref, out_ref):
    """One grid step = BB batch elements; MLP runs on BB*T flattened rows."""
    BB, E = q_ref.shape
    R = ub_ref.shape[0]          # R = BB * T flattened behavior rows
    T = R // BB
    H = b1_ref.shape[1]          # 64

    q = q_ref[...]               # (BB, E)   one query row per batch element
    ub = ub_ref[...]             # (R, E)    behavior rows, row r = b*T + t

    # fc1 query-only contribution (+ b1), hoisted out of the T dimension:
    # computed once per batch row on the MXU, then broadcast over T.
    qh = jnp.dot(q, w1q_ref[...], preferred_element_type=jnp.float32) + b1_ref[...]   # (BB, H)

    # Broadcast per-batch rows over their T behavior rows.
    qb = jnp.broadcast_to(q[:, None, :], (BB, T, E)).reshape(R, E)      # (R, E)
    qhb = jnp.broadcast_to(qh[:, None, :], (BB, T, H)).reshape(R, H)    # (R, H)

    # fc1 first Linear(4E -> 64), concat-free:
    #   [q, ub, q-ub, q*ub] @ W1 == q@(Wa+Wc) + ub@(Wb-Wc) + (q*ub)@Wd
    h1 = (qhb
          + jnp.dot(ub, w1ub_ref[...], preferred_element_type=jnp.float32)
          + jnp.dot(qb * ub, w1p_ref[...], preferred_element_type=jnp.float32))       # (R, H)

    # Dice(64, dim=3); eval-mode BatchNorm1d(eps=1e-9) is identity at fp32.
    x_p = jax.nn.sigmoid(h1)
    dice = h1 * (alpha_ref[...] + x_p * beta_ref[...])      # beta = 1 - alpha, (R, H)

    # fc1 second Linear(64->16) and fc2 Linear(16->1) folded wrapper-side into
    # w23 = W2@W3, b23 = b2@W3 + b3; done as VPU multiply + lane reduce
    # instead of an N=1 MXU matmul.
    scores = jnp.sum(dice * w23_ref[...], axis=-1, keepdims=True) + b23_ref[...]      # (R, 1)

    # Weighted sum-pool over the T behavior rows of each batch element.
    pooled = jnp.sum((scores * ub).reshape(BB, T, E), axis=1)                         # (BB, E)
    out_ref[...] = pooled.astype(out_ref.dtype)


def _pick_block_b(B, T, target_rows):
    """Largest batch tile with ~target_rows flattened MLP rows per grid step.

    Must divide B, and (unless it covers the whole batch) be a multiple of 8 so
    the (bb, E) / (bb*T, E) blocks satisfy the TPU sublane constraint.
    """
    cap = max(1, target_rows // max(T, 1))
    best = B
    for bb in range(1, B + 1):
        if B % bb or bb > cap:
            continue
        if bb != B and (bb % 8 or (bb * T) % 8):
            continue
        best = bb
    return best


def init_params(key, embedding_dim=4, hidden=(64, 16)):
    """Deterministic xavier-normal weights, zero biases, zero Dice alpha."""
    e4 = 4 * embedding_dim
    h1, h2 = hidden
    k1, k2, k3 = jax.random.split(key, 3)

    def xavier(k, fan_in, fan_out):
        std = jnp.sqrt(2.0 / (fan_in + fan_out))
        return (std * jax.random.normal(k, (fan_in, fan_out))).astype(jnp.float32)

    w1 = xavier(k1, e4, h1)                    # (4E, 64)
    b1 = jnp.zeros((1, h1), jnp.float32)
    alpha = jnp.zeros((1, h1), jnp.float32)    # Dice alpha, init zeros
    w2 = xavier(k2, h1, h2)                    # (64, 16)
    b2 = jnp.zeros((1, h2), jnp.float32)
    w3 = xavier(k3, h2, 1)                     # (16, 1)
    b3 = jnp.zeros((1, 1), jnp.float32)
    return (w1, b1, alpha, w2, b2, w3, b3)


def attention_sequence_pooling(query, behavior, params, *, target_rows=2048):
    B, _, E = query.shape
    T = behavior.shape[1]
    w1, b1, alpha, w2, b2, w3, b3 = params
    H = b1.shape[1]

    # ---- wrapper-side algebraic folds (tiny, computed once) ----
    w1q = w1[0 * E:1 * E] + w1[2 * E:3 * E]          # query + diff pieces     (E, H)
    w1ub = w1[1 * E:2 * E] - w1[2 * E:3 * E]         # behavior - diff pieces  (E, H)
    w1p = w1[3 * E:4 * E]                            # product piece           (E, H)
    w23 = (w2 @ w3).reshape(1, H)                    # fused Linear(64->16->1) (1, H)
    b23 = (b2 @ w3 + b3).reshape(1, 1)               # fused bias              (1, 1)
    beta = (1.0 - alpha).astype(jnp.float32)         # Dice (1 - alpha)        (1, H)

    # Row-flattened views (free metadata reshapes in XLA).
    q2 = query.reshape(B, E)
    ub2 = behavior.reshape(B * T, E)

    bb = _pick_block_b(B, T, target_rows)
    grid = (B // bb,)

    def fixed(shape):
        return pl.BlockSpec(shape, lambda i: (0,) * len(shape))

    out2 = pl.pallas_call(
        asp_kernel,
        out_shape=jax.ShapeDtypeStruct((B, E), query.dtype),
        grid=grid,
        in_specs=[
            pl.BlockSpec((bb, E), lambda i: (i, 0)),        # query rows
            pl.BlockSpec((bb * T, E), lambda i: (i, 0)),    # behavior rows
            fixed((E, H)), fixed((E, H)), fixed((E, H)),    # w1q, w1ub, w1p
            fixed((1, H)), fixed((1, H)), fixed((1, H)),    # b1, alpha, 1-alpha
            fixed((1, H)), fixed((1, 1)),                   # w23 row, b23
        ],
        out_specs=pl.BlockSpec((bb, E), lambda i: (i, 0)),
        compiler_params=pltpu.CompilerParams(
            dimension_semantics=("parallel",)),
    )(q2, ub2, w1q, w1ub, w1p, b1, alpha, beta, w23, b23)

    return out2.reshape(B, 1, E)


def reference_forward(query, behavior, params):
    """Plain-JAX reference of the original (unfolded) eval-mode forward."""
    w1, b1, alpha, w2, b2, w3, b3 = params
    B, T, E = behavior.shape
    queries = jnp.broadcast_to(query, (B, T, E))
    att_in = jnp.concatenate(
        [queries, behavior, queries - behavior, queries * behavior], axis=-1)
    h1 = att_in @ w1 + b1
    x_p = jax.nn.sigmoid(h1 / jnp.sqrt(1.0 + BN_EPS))
    d = alpha * (1.0 - x_p) * h1 + x_p * h1
    h2 = d @ w2 + b2
    w = h2 @ w3 + b3
    return jnp.sum(w * behavior, axis=1, keepdims=True)


def _run_case(B, T, E, params, seed):
    kq, kb = jax.random.split(jax.random.PRNGKey(seed), 2)
    query_ad = jax.random.normal(kq, (B, 1, E), dtype=jnp.float32)
    user_behavior = jax.random.normal(kb, (B, T, E), dtype=jnp.float32)

    out = attention_sequence_pooling(query_ad, user_behavior, params)
    out = jax.block_until_ready(out)

    ref = reference_forward(query_ad, user_behavior, params)
    assert out.shape == (B, 1, E)
    assert jnp.allclose(out, ref, atol=1e-5, rtol=1e-5)


if __name__ == "__main__":
    E = 4
    params = init_params(jax.random.PRNGKey(0), embedding_dim=E, hidden=(64, 16))

    # Use a non-zero Dice alpha so that code path is actually exercised
    # (PyTorch initializes it to zeros; trained values are non-zero).
    w1, b1, alpha, w2, b2, w3, b3 = params
    alpha = (0.3 * jax.random.normal(jax.random.PRNGKey(42), alpha.shape)
             ).astype(jnp.float32)
    params = (w1, b1, alpha, w2, b2, w3, b3)

    # Small case from the module spec (single grid step, full-batch block).
    _run_case(B=2, T=8, E=E, params=params, seed=1)

    # Larger case exercising the batched multi-step grid (BB=256 -> 2 steps).
    _run_case(B=512, T=8, E=E, params=params, seed=2)

    print("KERNEL_OK")
</pallas_src>

<mosaic_0001>
module attributes {stable_mosaic.version = 11 : i64} {
  func.func @asp_kernel(%arg0: i32, %arg1: memref<2x4xf32, #tpu.memory_space<vmem>>, %arg2: memref<16x4xf32, #tpu.memory_space<vmem>>, %arg3: memref<4x64xf32, #tpu.memory_space<vmem>>, %arg4: memref<4x64xf32, #tpu.memory_space<vmem>>, %arg5: memref<4x64xf32, #tpu.memory_space<vmem>>, %arg6: memref<1x64xf32, #tpu.memory_space<vmem>>, %arg7: memref<1x64xf32, #tpu.memory_space<vmem>>, %arg8: memref<1x64xf32, #tpu.memory_space<vmem>>, %arg9: memref<1x64xf32, #tpu.memory_space<vmem>>, %arg10: memref<1x1xf32, #tpu.memory_space<vmem>>, %arg11: memref<2x4xf32, #tpu.memory_space<vmem>>) attributes {dimension_semantics = [#tpu.dimension_semantics<parallel>], iteration_bounds = array<i64: 1>, scalar_prefetch = 0 : i64, scratch_operands = 0 : i64, tpu.core_type = #tpu.core_type<tc>, window_params = [{transform_indices = @transform_0, window_bounds = array<i64: 2, 4>}, {transform_indices = @transform_1, window_bounds = array<i64: 16, 4>}, {pipeline_mode = #tpu.pipeline_mode<synchronous>, transform_indices = @transform_2, window_bounds = array<i64: 4, 64>}, {pipeline_mode = #tpu.pipeline_mode<synchronous>, transform_indices = @transform_3, window_bounds = array<i64: 4, 64>}, {pipeline_mode = #tpu.pipeline_mode<synchronous>, transform_indices = @transform_4, window_bounds = array<i64: 4, 64>}, {pipeline_mode = #tpu.pipeline_mode<synchronous>, transform_indices = @transform_5, window_bounds = array<i64: 1, 64>}, {pipeline_mode = #tpu.pipeline_mode<synchronous>, transform_indices = @transform_6, window_bounds = array<i64: 1, 64>}, {pipeline_mode = #tpu.pipeline_mode<synchronous>, transform_indices = @transform_7, window_bounds = array<i64: 1, 64>}, {pipeline_mode = #tpu.pipeline_mode<synchronous>, transform_indices = @transform_8, window_bounds = array<i64: 1, 64>}, {pipeline_mode = #tpu.pipeline_mode<synchronous>, transform_indices = @transform_9, window_bounds = array<i64: 1, 1>}, {transform_indices = @transform_10, window_bounds = array<i64: 2, 4>}]} {
    %c0 = arith.constant 0 : index
    %c0_0 = arith.constant 0 : index
    %0 = vector.load %arg1[%c0, %c0_0] : memref<2x4xf32, #tpu.memory_space<vmem>>, vector<2x4xf32>
    %c0_1 = arith.constant 0 : index
    %c0_2 = arith.constant 0 : index
    %1 = vector.load %arg2[%c0_1, %c0_2] : memref<16x4xf32, #tpu.memory_space<vmem>>, vector<16x4xf32>
    %c0_3 = arith.constant 0 : index
    %c0_4 = arith.constant 0 : index
    %2 = vector.load %arg3[%c0_3, %c0_4] : memref<4x64xf32, #tpu.memory_space<vmem>>, vector<4x64xf32>
    %cst = arith.constant dense<0.000000e+00> : vector<2x64xf32>
    %3 = tpu.matmul %0, %2, %cst {dimension_numbers = #tpu.dot_dimension_numbers<[1], [0], [0], [1], [0, 0, 1, 1], [], []>} : vector<2x4xf32>, vector<4x64xf32>, vector<2x64xf32> -> vector<2x64xf32>
    %c0_5 = arith.constant 0 : index
    %c0_6 = arith.constant 0 : index
    %4 = vector.load %arg6[%c0_5, %c0_6] : memref<1x64xf32, #tpu.memory_space<vmem>>, vector<1x64xf32>
    %5 = vector.broadcast %4 : vector<1x64xf32> to vector<2x64xf32>
    %6 = arith.addf %3, %5 : vector<2x64xf32>
    %7 = vector.shape_cast %0 : vector<2x4xf32> to vector<2x1x4xf32>
    %8 = vector.shape_cast %7 : vector<2x1x4xf32> to vector<2x1x4xf32>
    %9 = vector.broadcast %8 : vector<2x1x4xf32> to vector<2x8x4xf32>
    %10 = vector.shape_cast %9 : vector<2x8x4xf32> to vector<16x4xf32>
    %11 = vector.shape_cast %6 : vector<2x64xf32> to vector<2x1x64xf32>
    %12 = vector.shape_cast %11 : vector<2x1x64xf32> to vector<2x1x64xf32>
    %13 = vector.broadcast %12 : vector<2x1x64xf32> to vector<2x8x64xf32>
    %14 = vector.shape_cast %13 : vector<2x8x64xf32> to vector<16x64xf32>
    %c0_7 = arith.constant 0 : index
    %c0_8 = arith.constant 0 : index
    %15 = vector.load %arg4[%c0_7, %c0_8] : memref<4x64xf32, #tpu.memory_space<vmem>>, vector<4x64xf32>
    %cst_9 = arith.constant dense<0.000000e+00> : vector<16x64xf32>
    %16 = tpu.matmul %1, %15, %cst_9 {dimension_numbers = #tpu.dot_dimension_numbers<[1], [0], [0], [1], [0, 0, 1, 1], [], []>} : vector<16x4xf32>, vector<4x64xf32>, vector<16x64xf32> -> vector<16x64xf32>
    %17 = arith.addf %14, %16 : vector<16x64xf32>
    %18 = arith.mulf %10, %1 : vector<16x4xf32>
    %c0_10 = arith.constant 0 : index
    %c0_11 = arith.constant 0 : index
    %19 = vector.load %arg5[%c0_10, %c0_11] : memref<4x64xf32, #tpu.memory_space<vmem>>, vector<4x64xf32>
    %cst_12 = arith.constant dense<0.000000e+00> : vector<16x64xf32>
    %20 = tpu.matmul %18, %19, %cst_12 {dimension_numbers = #tpu.dot_dimension_numbers<[1], [0], [0], [1], [0, 0, 1, 1], [], []>} : vector<16x4xf32>, vector<4x64xf32>, vector<16x64xf32> -> vector<16x64xf32>
    %21 = arith.addf %17, %20 : vector<16x64xf32>
    %22 = arith.negf %21 : vector<16x64xf32>
    %23 = math.exp %22 : vector<16x64xf32>
    %cst_13 = arith.constant 1.000000e+00 : f32
    %24 = vector.broadcast %cst_13 : f32 to vector<16x64xf32>
    %25 = arith.addf %24, %23 : vector<16x64xf32>
    %26 = arith.divf %24, %25 : vector<16x64xf32>
    %c0_14 = arith.constant 0 : index
    %c0_15 = arith.constant 0 : index
    %27 = vector.load %arg7[%c0_14, %c0_15] : memref<1x64xf32, #tpu.memory_space<vmem>>, vector<1x64xf32>
    %c0_16 = arith.constant 0 : index
    %c0_17 = arith.constant 0 : index
    %28 = vector.load %arg8[%c0_16, %c0_17] : memref<1x64xf32, #tpu.memory_space<vmem>>, vector<1x64xf32>
    %29 = vector.broadcast %28 : vector<1x64xf32> to vector<16x64xf32>
    %30 = arith.mulf %26, %29 : vector<16x64xf32>
    %31 = vector.broadcast %27 : vector<1x64xf32> to vector<16x64xf32>
    %32 = arith.addf %31, %30 : vector<16x64xf32>
    %33 = arith.mulf %21, %32 : vector<16x64xf32>
    %c0_18 = arith.constant 0 : index
    %c0_19 = arith.constant 0 : index
    %34 = vector.load %arg9[%c0_18, %c0_19] : memref<1x64xf32, #tpu.memory_space<vmem>>, vector<1x64xf32>
    %35 = vector.broadcast %34 : vector<1x64xf32> to vector<16x64xf32>
    %36 = arith.mulf %33, %35 : vector<16x64xf32>
    %cst_20 = arith.constant dense<0.000000e+00> : vector<16xf32>
    %37 = vector.multi_reduction <add>, %36, %cst_20 [1] : vector<16x64xf32> to vector<16xf32>
    %38 = vector.shape_cast %37 : vector<16xf32> to vector<16x1xf32>
    %c0_21 = arith.constant 0 : index
    %c0_22 = arith.constant 0 : index
    %39 = vector.load %arg10[%c0_21, %c0_22] : memref<1x1xf32, #tpu.memory_space<vmem>>, vector<1x1xf32>
    %40 = vector.broadcast %39 : vector<1x1xf32> to vector<16x1xf32>
    %41 = arith.addf %38, %40 : vector<16x1xf32>
    %42 = vector.broadcast %41 : vector<16x1xf32> to vector<16x4xf32>
    %43 = arith.mulf %42, %1 : vector<16x4xf32>
    %44 = vector.shape_cast %43 : vector<16x4xf32> to vector<2x8x4xf32>
    %cst_23 = arith.constant dense<0.000000e+00> : vector<2x4xf32>
    %45 = vector.multi_reduction <add>, %44, %cst_23 [1] : vector<2x8x4xf32> to vector<2x4xf32>
    %c0_24 = arith.constant 0 : index
    %c0_25 = arith.constant 0 : index
    %46 = vector.load %arg11[%c0_24, %c0_25] : memref<2x4xf32, #tpu.memory_space<vmem>>, vector<2x4xf32>
    tpu.vector_store %arg11[%c0_24, %c0_25], %45 {strides = array<i32>} : memref<2x4xf32, #tpu.memory_space<vmem>>, vector<2x4xf32>,
    return
  }
  func.func @transform_0(%arg0: i32) -> (i32, i32) {
    %c0_i32 = arith.constant 0 : i32
    %c0_i32_0 = arith.constant 0 : i32
    return %arg0, %c0_i32 : i32, i32
  }
  func.func @transform_1(%arg0: i32) -> (i32, i32) {
    %c0_i32 = arith.constant 0 : i32
    %c0_i32_0 = arith.constant 0 : i32
    return %arg0, %c0_i32 : i32, i32
  }
  func.func @transform_2(%arg0: i32) -> (i32, i32) {
    %c0_i32 = arith.constant 0 : i32
    %c0_i32_0 = arith.constant 0 : i32
    %c0_i32_1 = arith.constant 0 : i32
    return %c0_i32, %c0_i32_0 : i32, i32
  }
  func.func @transform_3(%arg0: i32) -> (i32, i32) {
    %c0_i32 = arith.constant 0 : i32
    %c0_i32_0 = arith.constant 0 : i32
    %c0_i32_1 = arith.constant 0 : i32
    return %c0_i32, %c0_i32_0 : i32, i32
  }
  func.func @transform_4(%arg0: i32) -> (i32, i32) {
    %c0_i32 = arith.constant 0 : i32
    %c0_i32_0 = arith.constant 0 : i32
    %c0_i32_1 = arith.constant 0 : i32
    return %c0_i32, %c0_i32_0 : i32, i32
  }
  func.func @transform_5(%arg0: i32) -> (i32, i32) {
    %c0_i32 = arith.constant 0 : i32
    %c0_i32_0 = arith.constant 0 : i32
    %c0_i32_1 = arith.constant 0 : i32
    return %c0_i32, %c0_i32_0 : i32, i32
  }
  func.func @transform_6(%arg0: i32) -> (i32, i32) {
    %c0_i32 = arith.constant 0 : i32
    %c0_i32_0 = arith.constant 0 : i32
    %c0_i32_1 = arith.constant 0 : i32
    return %c0_i32, %c0_i32_0 : i32, i32
  }
  func.func @transform_7(%arg0: i32) -> (i32, i32) {
    %c0_i32 = arith.constant 0 : i32
    %c0_i32_0 = arith.constant 0 : i32
    %c0_i32_1 = arith.constant 0 : i32
    return %c0_i32, %c0_i32_0 : i32, i32
  }
  func.func @transform_8(%arg0: i32) -> (i32, i32) {
    %c0_i32 = arith.constant 0 : i32
    %c0_i32_0 = arith.constant 0 : i32
    %c0_i32_1 = arith.constant 0 : i32
    return %c0_i32, %c0_i32_0 : i32, i32
  }
  func.func @transform_9(%arg0: i32) -> (i32, i32) {
    %c0_i32 = arith.constant 0 : i32
    %c0_i32_0 = arith.constant 0 : i32
    %c0_i32_1 = arith.constant 0 : i32
    return %c0_i32, %c0_i32_0 : i32, i32
  }
  func.func @transform_10(%arg0: i32) -> (i32, i32) {
    %c0_i32 = arith.constant 0 : i32
    %c0_i32_0 = arith.constant 0 : i32
    return %arg0, %c0_i32 : i32, i32
  }
}

</mosaic_0001>

<llo_original>
// kernel: tpu_custom_call.1
$region0: #{tpu_custom_call.1}
  #allocation0 [shape = 'u32[]', space=smem, size = 0x4, offset = 0x4, fixed_abs, tag = 'smem constant byte address 0x4 - core index']
  #allocation1 [shape = 'u32[144,128]{1,0:T(1,128)}', space=vmem, size = 0x12000, scoped, tag = 'internal scratch']
  #allocation2 [shape = 'f32[1,1]{1,0:T(1,128)S(1)}', space=vmem, size = 0x200, scoped, tag = 'scoped memory for tpu_custom_call.1']
  %s0 = inlined_call_operand.vmem [shape: f32[2,4], index: 0, kind: input, shape index: {}]
  %s1 = inlined_call_operand.vmem [shape: f32[16,4], index: 1, kind: input, shape index: {}]
  %s2 = inlined_call_operand.vmem [shape: f32[4,64], index: 2, kind: input, shape index: {}]
  %s3 = inlined_call_operand.vmem [shape: f32[4,64], index: 3, kind: input, shape index: {}]
  %s4 = inlined_call_operand.vmem [shape: f32[4,64], index: 4, kind: input, shape index: {}]
  %s5 = inlined_call_operand.vmem [shape: f32[1,64], index: 5, kind: input, shape index: {}]
  %s6 = inlined_call_operand.vmem [shape: f32[1,64], index: 6, kind: input, shape index: {}]
  %s7 = inlined_call_operand.vmem [shape: f32[1,64], index: 7, kind: input, shape index: {}]
  %s8 = inlined_call_operand.vmem [shape: f32[1,64], index: 8, kind: input, shape index: {}]
  %s9 = inlined_call_operand.<no memory space> [shape: f32[1,1], index: 9, kind: input, shape index: {}]
  %s10 = inlined_call_operand.hbm [shape: f32[2,4], index: 10, kind: output, shape index: {}]
  %s11 = sld [smem:[#allocation0]]
  $region50: #{tpu_custom_call.1} parent=0
    _
  %s13 = ssub.s32 1, %s11
  %s14 = scalar_select 0, %s13, %s11
  %v15 = vstv %s9
  %16 = vst [vmem:[#allocation2] sm:$0x1] %v15
  $region1: #{tpu_custom_call.1} parent=0
    #allocation3 [shape = 'u8[1024]{0}', space=vmem, size = 0x400, scoped, tag = 'output window, operand 0, single buffered']
    #allocation4 [shape = 's32[1]{0}', space=sflag, size = 0x4, scoped, tag = 'scoped memory for tpu_custom_call.1']
    %17 = vsyncpa [#allocation4], 0
    // Predicated region
    $region2: #{tpu_custom_call.1} parent=1 // pred_check
      _
    $region3: #{tpu_custom_call.1} parent=1 // pred_check_branch
      %19 = sbr.rel (0) target = $region5
    $region4: #{tpu_custom_call.1} parent=1 // pred_region
      _
    $region5: #{tpu_custom_call.1} parent=1 // pred_fallthru
      _
    // Predicated region
    $region6: #{tpu_custom_call.1} parent=1 // pred_check
      _
    $region7: #{tpu_custom_call.1} parent=1 // pred_check_branch
      %21 = sbr.rel (0) target = $region9
    $region8: #{tpu_custom_call.1} parent=1 // pred_region
      _
    $region9: #{tpu_custom_call.1} parent=1 // pred_fallthru
      _
    // Predicated region
    $region10: #{tpu_custom_call.1} parent=1 // pred_check
      _
    $region11: #{tpu_custom_call.1} parent=1 // pred_check_branch
      %23 = sbr.rel (0) target = $region13
    $region12: #{tpu_custom_call.1} parent=1 // pred_region
      _
    $region13: #{tpu_custom_call.1} parent=1 // pred_fallthru
      _
    // Predicated region
    $region14: #{tpu_custom_call.1} parent=1 // pred_check
      _
    $region15: #{tpu_custom_call.1} parent=1 // pred_check_branch
      %25 = sbr.rel (0) target = $region17
    $region16: #{tpu_custom_call.1} parent=1 // pred_region
      _
    $region17: #{tpu_custom_call.1} parent=1 // pred_fallthru
      _
    // Predicated region
    $region18: #{tpu_custom_call.1} parent=1 // pred_check
      _
    $region19: #{tpu_custom_call.1} parent=1 // pred_check_branch
      %27 = sbr.rel (0) target = $region21
    $region20: #{tpu_custom_call.1} parent=1 // pred_region
      _
    $region21: #{tpu_custom_call.1} parent=1 // pred_fallthru
      _
    // Predicated region
    $region22: #{tpu_custom_call.1} parent=1 // pred_check
      _
    $region23: #{tpu_custom_call.1} parent=1 // pred_check_branch
      %29 = sbr.rel (0) target = $region25
    $region24: #{tpu_custom_call.1} parent=1 // pred_region
      _
    $region25: #{tpu_custom_call.1} parent=1 // pred_fallthru
      _
    // Predicated region
    $region26: #{tpu_custom_call.1} parent=1 // pred_check
      _
    $region27: #{tpu_custom_call.1} parent=1 // pred_check_branch
      %31 = sbr.rel (0) target = $region29
    $region28: #{tpu_custom_call.1} parent=1 // pred_region
      _
    $region29: #{tpu_custom_call.1} parent=1 // pred_fallthru
      _
    // Predicated region
    $region30: #{tpu_custom_call.1} parent=1 // pred_check
      _
    $region31: #{tpu_custom_call.1} parent=1 // pred_check_branch
      %33 = sbr.rel (0) target = $region33
    $region32: #{tpu_custom_call.1} parent=1 // pred_region
      _
    $region33: #{tpu_custom_call.1} parent=1 // pred_fallthru
      _
    // Predicated region
    $region34: #{tpu_custom_call.1} parent=1 // pred_check
      _
    $region35: #{tpu_custom_call.1} parent=1 // pred_check_branch
      %35 = sbr.rel (0) target = $region37
    $region36: #{tpu_custom_call.1} parent=1 // pred_region
      _
    $region37: #{tpu_custom_call.1} parent=1 // pred_fallthru
      _
    // Predicated region
    $region38: #{tpu_custom_call.1} parent=1 // pred_check
      _
    $region39: #{tpu_custom_call.1} parent=1 // pred_check_branch
      %37 = sbr.rel (0) target = $region41
    $region40: #{tpu_custom_call.1} parent=1 // pred_region
      _
    $region41: #{tpu_custom_call.1} parent=1 // pred_fallthru
      _
    %v38 = vld [vmem:[%s0] sm:$0x3]
    %v39 = vld [vmem:[%s1] sm:$0xff]
    %v40 = vld [vmem:[%s1 + $0x8] sm:$0xff]
    %v41 = vld [vmem:[%s2] sm:$0xf]
    %v42 = vld [vmem:[%s5] sm:$0x1]
    %v44 = vlaneseq
    %v45 = vshrl.u32 %v44, 7
    %v46 = vsub.s32 0, %v45
    %v47 = vrot.slane %v42, %v46
    %vm49 = vcmask 31744
    %v51 = vsel %vm49, %v38, 0
    %vm53 = vcmask 1043456
    %v55 = vsel %vm53, %v41, 0
    %57 = vmatprep.subr.mxu0 0.0
    %58 = vmatpush1.msra.mxu0 0.0
    %59 = vmatprep.subr.mxu0 0.0
    %60 = vmatpush1.msra.mxu0 0.0
    %61 = vmatprep.subr.mxu0 0.0
    %62 = vmatpush1.msra.mxu0 0.0
    %63 = vmatprep.subr.mxu0 0.0
    %64 = vmatpush1.msra.mxu0 0.0
    %65 = vmatprep.subr.mxu0 0.0
    %66 = vmatpush1.msra.mxu0 0.0
    %67 = vmatprep.subr.mxu0 0.0
    %68 = vmatpush1.msra.mxu0 0.0
    %69 = vmatprep.subr.mxu0 0.0
    %70 = vmatpush1.msra.mxu0 0.0
    %71 = vmatprep.subr.mxu0 0.0
    %72 = vmatpush1.msra.mxu0 0.0
    %73 = vmatprep.subr.mxu0 0.0
    %74 = vmatpush1.msra.mxu0 0.0
    %75 = vmatprep.subr.mxu0 0.0
    %76 = vmatpush1.msra.mxu0 0.0
    %77 = vmatprep.subr.mxu0 0.0
    %78 = vmatpush1.msra.mxu0 0.0
    %79 = vmatprep.subr.mxu0 0.0
    %80 = vmatpush1.msra.mxu0 0.0
    %81 = vmatprep.subr.mxu0 0.0
    %82 = vmatpush1.msra.mxu0 0.0
    %83 = vmatprep.subr.mxu0 0.0
    %84 = vmatpush1.msra.mxu0 0.0
    %85 = vmatprep.subr.mxu0 0.0
    %86 = vmatpush1.msra.mxu0 0.0
    %87 = vmatprep.subr.mxu0 0.0
    %88 = vmatpush1.msra.mxu0 %v55
    %89 = vmatprep.subr.mxu0 0.0
    %90 = vmatpush2.msra.mxu0 0.0
    %91 = vmatprep.subr.mxu0 0.0
    %92 = vmatpush2.msra.mxu0 0.0
    %93 = vmatprep.subr.mxu0 0.0
    %94 = vmatpush2.msra.mxu0 0.0
    %95 = vmatprep.subr.mxu0 0.0
    %96 = vmatpush2.msra.mxu0 0.0
    %97 = vmatprep.subr.mxu0 0.0
    %98 = vmatpush2.msra.mxu0 0.0
    %99 = vmatprep.subr.mxu0 0.0
    %100 = vmatpush2.msra.mxu0 0.0
    %101 = vmatprep.subr.mxu0 0.0
    %102 = vmatpush2.msra.mxu0 0.0
    %103 = vmatprep.subr.mxu0 0.0
    %104 = vmatpush2.msra.mxu0 0.0
    %105 = vmatprep.subr.mxu0 0.0
    %106 = vmatpush2.msra.mxu0 0.0
    %107 = vmatprep.subr.mxu0 0.0
    %108 = vmatpush2.msra.mxu0 0.0
    %109 = vmatprep.subr.mxu0 0.0
    %110 = vmatpush2.msra.mxu0 0.0
    %111 = vmatprep.subr.mxu0 0.0
    %112 = vmatpush2.msra.mxu0 0.0
    %113 = vmatprep.subr.mxu0 0.0
    %114 = vmatpush2.msra.mxu0 0.0
    %115 = vmatprep.subr.mxu0 0.0
    %116 = vmatpush2.msra.mxu0 0.0
    %117 = vmatprep.subr.mxu0 0.0
    %118 = vmatpush2.msra.mxu0 0.0
    %119 = vmatprep.subr.mxu0 0.0
    %120 = vmatpush2.msra.mxu0 0.0
    %121 = vmatprep.mubr.f32.mxu0 0.0
    %122 = vmatmul.mubr.f32.gmra.mxu0 %v51
    %v123 = vpop.f32.mrf.mxu0
    %v124 = vadd.f32 %v47, %v123
    %v125 = vpop.f32.mrf.mxu0
    %126 = vdwg.mxu0
    %v128 = vunpack.c.l.s4 1966171168
    %v129 = vunpack.c.0.s8 %v128
    %v130 = vlaneseq
    %v131 = vshrl.u32 %v130, 7
    %v132 = vsub.s32 %v129, %v131
    %v133 = vrot.slane %v38, %v132
    %v134 = vcombine.high %v133, %v133
    %v136 = vunpack.c.l.s4 1966171168
    %v137 = vunpack.c.0.s8 %v136
    %v138 = vlaneseq
    %v139 = vshrl.u32 %v138, 7
    %v140 = vsub.s32 %v137, %v139
    %v141 = vrot.slane %v133, %v140
    %v143 = vunpack.c.l.s4 1966171168
    %v144 = vunpack.c.0.s8 %v143
    %v145 = vlaneseq
    %v146 = vshrl.u32 %v145, 7
    %v147 = vsub.s32 %v144, %v146
    %v148 = vrot.slane %v134, %v147
    %v149 = vlaneseq
    %v150 = vshrl.u32 %v149, 7
    %v151 = vsub.s32 0, %v150
    %v152 = vrot.slane %v141, %v151
    %v153 = vlaneseq
    %v154 = vshrl.u32 %v153, 7
    %v155 = vsub.s32 0, %v154
    %v156 = vrot.slane %v148, %v155
    %v161 = vunpack.c.l.s4 1966171168
    %v162 = vunpack.c.0.s8 %v161
    %v163 = vlaneseq
    %v164 = vshrl.u32 %v163, 7
    %v165 = vsub.s32 %v162, %v164
    %v166 = vrot.slane %v124, %v165
    %v167 = vcombine.high %v166, %v166
    %v169 = vunpack.c.l.s4 1966171168
    %v170 = vunpack.c.0.s8 %v169
    %v171 = vlaneseq
    %v172 = vshrl.u32 %v171, 7
    %v173 = vsub.s32 %v170, %v172
    %v174 = vrot.slane %v166, %v173
    %v176 = vunpack.c.l.s4 1966171168
    %v177 = vunpack.c.0.s8 %v176
    %v178 = vlaneseq
    %v179 = vshrl.u32 %v178, 7
    %v180 = vsub.s32 %v177, %v179
    %v181 = vrot.slane %v167, %v180
    %v182 = vlaneseq
    %v183 = vshrl.u32 %v182, 7
    %v184 = vsub.s32 0, %v183
    %v185 = vrot.slane %v174, %v184
    %v186 = vlaneseq
    %v187 = vshrl.u32 %v186, 7
    %v188 = vsub.s32 0, %v187
    %v189 = vrot.slane %v181, %v188
    %v192 = vld [vmem:[%s3] sm:$0xf]
    %v194 = vsel %vm49, %v39, 0
    %v197 = vsel %vm49, %v40, 0
    %v200 = vsel %vm53, %v192, 0
    %202 = vmatprep.subr.mxu0 0.0
    %203 = vmatpush1.msra.mxu0 0.0
    %204 = vmatprep.subr.mxu0 0.0
    %205 = vmatpush1.msra.mxu0 0.0
    %206 = vmatprep.subr.mxu0 0.0
    %207 = vmatpush1.msra.mxu0 0.0
    %208 = vmatprep.subr.mxu0 0.0
    %209 = vmatpush1.msra.mxu0 0.0
    %210 = vmatprep.subr.mxu0 0.0
    %211 = vmatpush1.msra.mxu0 0.0
    %212 = vmatprep.subr.mxu0 0.0
    %213 = vmatpush1.msra.mxu0 0.0
    %214 = vmatprep.subr.mxu0 0.0
    %215 = vmatpush1.msra.mxu0 0.0
    %216 = vmatprep.subr.mxu0 0.0
    %217 = vmatpush1.msra.mxu0 0.0
    %218 = vmatprep.subr.mxu0 0.0
    %219 = vmatpush1.msra.mxu0 0.0
    %220 = vmatprep.subr.mxu0 0.0
    %221 = vmatpush1.msra.mxu0 0.0
    %222 = vmatprep.subr.mxu0 0.0
    %223 = vmatpush1.msra.mxu0 0.0
    %224 = vmatprep.subr.mxu0 0.0
    %225 = vmatpush1.msra.mxu0 0.0
    %226 = vmatprep.subr.mxu0 0.0
    %227 = vmatpush1.msra.mxu0 0.0
    %228 = vmatprep.subr.mxu0 0.0
    %229 = vmatpush1.msra.mxu0 0.0
    %230 = vmatprep.subr.mxu0 0.0
    %231 = vmatpush1.msra.mxu0 0.0
    %232 = vmatprep.subr.mxu0 0.0
    %233 = vmatpush1.msra.mxu0 %v200
    %234 = vmatprep.subr.mxu0 0.0
    %235 = vmatpush2.msra.mxu0 0.0
    %236 = vmatprep.subr.mxu0 0.0
    %237 = vmatpush2.msra.mxu0 0.0
    %238 = vmatprep.subr.mxu0 0.0
    %239 = vmatpush2.msra.mxu0 0.0
    %240 = vmatprep.subr.mxu0 0.0
    %241 = vmatpush2.msra.mxu0 0.0
    %242 = vmatprep.subr.mxu0 0.0
    %243 = vmatpush2.msra.mxu0 0.0
    %244 = vmatprep.subr.mxu0 0.0
    %245 = vmatpush2.msra.mxu0 0.0
    %246 = vmatprep.subr.mxu0 0.0
    %247 = vmatpush2.msra.mxu0 0.0
    %248 = vmatprep.subr.mxu0 0.0
    %249 = vmatpush2.msra.mxu0 0.0
    %250 = vmatprep.subr.mxu0 0.0
    %251 = vmatpush2.msra.mxu0 0.0
    %252 = vmatprep.subr.mxu0 0.0
    %253 = vmatpush2.msra.mxu0 0.0
    %254 = vmatprep.subr.mxu0 0.0
    %255 = vmatpush2.msra.mxu0 0.0
    %256 = vmatprep.subr.mxu0 0.0
    %257 = vmatpush2.msra.mxu0 0.0
    %258 = vmatprep.subr.mxu0 0.0
    %259 = vmatpush2.msra.mxu0 0.0
    %260 = vmatprep.subr.mxu0 0.0
    %261 = vmatpush2.msra.mxu0 0.0
    %262 = vmatprep.subr.mxu0 0.0
    %263 = vmatpush2.msra.mxu0 0.0
    %264 = vmatprep.subr.mxu0 0.0
    %265 = vmatpush2.msra.mxu0 0.0
    %266 = vmatprep.mubr.f32.mxu0 0.0
    %267 = vmatmul.mubr.f32.gmra.mxu0 %v194
    %v268 = vpop.f32.mrf.mxu0
    %v269 = vadd.f32 0.0, %v268
    %v270 = vpop.f32.mrf.mxu0
    %271 = vmatprep.mubr.f32.mxu0 0.0
    %272 = vmatmul.mubr.f32.gmra.mxu0 %v197
    %v273 = vpop.f32.mrf.mxu0
    %v274 = vadd.f32 0.0, %v273
    %v275 = vpop.f32.mrf.mxu0
    %276 = vdwg.mxu0
    %v277 = vadd.f32 %v185, %v269
    %v278 = vadd.f32 %v189, %v274
    %v279 = vmul.f32 %v152, %v39
    %v280 = vmul.f32 %v156, %v40
    %v281 = vld [vmem:[%s4] sm:$0xf]
    %v283 = vsel %vm49, %v279, 0
    %v286 = vsel %vm49, %v280, 0
    %v289 = vsel %vm53, %v281, 0
    %291 = vmatprep.subr.mxu0 0.0
    %292 = vmatpush1.msra.mxu0 0.0
    %293 = vmatprep.subr.mxu0 0.0
    %294 = vmatpush1.msra.mxu0 0.0
    %295 = vmatprep.subr.mxu0 0.0
    %296 = vmatpush1.msra.mxu0 0.0
    %297 = vmatprep.subr.mxu0 0.0
    %298 = vmatpush1.msra.mxu0 0.0
    %299 = vmatprep.subr.mxu0 0.0
    %300 = vmatpush1.msra.mxu0 0.0
    %301 = vmatprep.subr.mxu0 0.0
    %302 = vmatpush1.msra.mxu0 0.0
    %303 = vmatprep.subr.mxu0 0.0
    %304 = vmatpush1.msra.mxu0 0.0
    %305 = vmatprep.subr.mxu0 0.0
    %306 = vmatpush1.msra.mxu0 0.0
    %307 = vmatprep.subr.mxu0 0.0
    %308 = vmatpush1.msra.mxu0 0.0
    %309 = vmatprep.subr.mxu0 0.0
    %310 = vmatpush1.msra.mxu0 0.0
    %311 = vmatprep.subr.mxu0 0.0
    %312 = vmatpush1.msra.mxu0 0.0
    %313 = vmatprep.subr.mxu0 0.0
    %314 = vmatpush1.msra.mxu0 0.0
    %315 = vmatprep.subr.mxu0 0.0
    %316 = vmatpush1.msra.mxu0 0.0
    %317 = vmatprep.subr.mxu0 0.0
    %318 = vmatpush1.msra.mxu0 0.0
    %319 = vmatprep.subr.mxu0 0.0
    %320 = vmatpush1.msra.mxu0 0.0
    %321 = vmatprep.subr.mxu0 0.0
    %322 = vmatpush1.msra.mxu0 %v289
    %323 = vmatprep.subr.mxu0 0.0
    %324 = vmatpush2.msra.mxu0 0.0
    %325 = vmatprep.subr.mxu0 0.0
    %326 = vmatpush2.msra.mxu0 0.0
    %327 = vmatprep.subr.mxu0 0.0
    %328 = vmatpush2.msra.mxu0 0.0
    %329 = vmatprep.subr.mxu0 0.0
    %330 = vmatpush2.msra.mxu0 0.0
    %331 = vmatprep.subr.mxu0 0.0
    %332 = vmatpush2.msra.mxu0 0.0
    %333 = vmatprep.subr.mxu0 0.0
    %334 = vmatpush2.msra.mxu0 0.0
    %335 = vmatprep.subr.mxu0 0.0
    %336 = vmatpush2.msra.mxu0 0.0
    %337 = vmatprep.subr.mxu0 0.0
    %338 = vmatpush2.msra.mxu0 0.0
    %339 = vmatprep.subr.mxu0 0.0
    %340 = vmatpush2.msra.mxu0 0.0
    %341 = vmatprep.subr.mxu0 0.0
    %342 = vmatpush2.msra.mxu0 0.0
    %343 = vmatprep.subr.mxu0 0.0
    %344 = vmatpush2.msra.mxu0 0.0
    %345 = vmatprep.subr.mxu0 0.0
    %346 = vmatpush2.msra.mxu0 0.0
    %347 = vmatprep.subr.mxu0 0.0
    %348 = vmatpush2.msra.mxu0 0.0
    %349 = vmatprep.subr.mxu0 0.0
    %350 = vmatpush2.msra.mxu0 0.0
    %351 = vmatprep.subr.mxu0 0.0
    %352 = vmatpush2.msra.mxu0 0.0
    %353 = vmatprep.subr.mxu0 0.0
    %354 = vmatpush2.msra.mxu0 0.0
    %355 = vmatprep.mubr.f32.mxu0 0.0
    %356 = vmatmul.mubr.f32.gmra.mxu0 %v283
    %v357 = vpop.f32.mrf.mxu0
    %v358 = vadd.f32 0.0, %v357
    %v359 = vpop.f32.mrf.mxu0
    %360 = vmatprep.mubr.f32.mxu0 0.0
    %361 = vmatmul.mubr.f32.gmra.mxu0 %v286
    %v362 = vpop.f32.mrf.mxu0
    %v363 = vadd.f32 0.0, %v362
    %v364 = vpop.f32.mrf.mxu0
    %365 = vdwg.mxu0
    %v366 = vadd.f32 %v277, %v358
    %v367 = vadd.f32 %v278, %v363
    %v368 = vxor.u32 %v366, 2147483648
    %v369 = vxor.u32 %v367, 2147483648
    %v370 = vmul.f32 %v368, 1.442695
    %v371 = vpow.pop %v370
    %v372 = vmul.f32 %v369, 1.442695
    %v373 = vpow.pop %v372
    %v374 = vadd.f32 %v371, 1.0
    %v375 = vadd.f32 %v373, 1.0
    %v376 = vrcp.pop %v374
    %v377 = vmul.f32 1.0, %v376
    %v378 = vrcp.pop %v375
    %v379 = vmul.f32 1.0, %v378
    %v380 = vld [vmem:[%s6] sm:$0x1]
    %v381 = vld [vmem:[%s7] sm:$0x1]
    %v383 = vlaneseq
    %v384 = vshrl.u32 %v383, 7
    %v385 = vsub.s32 0, %v384
    %v386 = vrot.slane %v381, %v385
    %v388 = vmul.f32 %v377, %v386
    %v389 = vmul.f32 %v379, %v386
    %v391 = vlaneseq
    %v392 = vshrl.u32 %v391, 7
    %v393 = vsub.s32 0, %v392
    %v394 = vrot.slane %v380, %v393
    %v396 = vadd.f32 %v394, %v388
    %v397 = vadd.f32 %v394, %v389
    %v398 = vmul.f32 %v366, %v396
    %v399 = vmul.f32 %v367, %v397
    %v400 = vld [vmem:[%s8] sm:$0x1]
    %v402 = vlaneseq
    %v403 = vshrl.u32 %v402, 7
    %v404 = vsub.s32 0, %v403
    %v405 = vrot.slane %v400, %v404
    %v407 = vmul.f32 %v398, %v405
    %v408 = vmul.f32 %v399, %v405
    %vm409 = vcmask 523264
    %v410 = vsel %vm409, %v407, 0.0
    %411 = vadd.xlane.f32.xlu0 %v410
    %v412 = vpop.xlane.xlu0 %411
    %v413 = vsel %vm409, %v408, 0.0
    %414 = vadd.xlane.f32.xlu0 %v413
    %v415 = vpop.xlane.xlu0 %414
    %v416 = vld [vmem:[#allocation2] sm:$0x1]
    %v418 = vlaneseq
    %v419 = vshrl.u32 %v418, 7
    %v420 = vsub.s32 0, %v419
    %v421 = vrot.slane %v416, %v420
    %v423 = vadd.f32 %v412, %v421
    %v424 = vadd.f32 %v415, %v421
    %426 = vset.pattern.permute.xlu0 0
    %427 = vperm.xlu0 %426, %v423
    %v428 = vpop.permute.xlu0 %427
    %431 = vset.pattern.permute.xlu0 0
    %432 = vperm.xlu0 %431, %v424
    %v433 = vpop.permute.xlu0 %432
    %v435 = vmul.f32 %v428, %v39
    %v436 = vmul.f32 %v433, %v40
    %v437 = vsel %vm49, %v435, 0.0
    %v438 = vrot.slane %v437, 4
    %v439 = vadd.f32 %v437, %v438
    %v440 = vrot.slane %v439, 2
    %v441 = vadd.f32 %v439, %v440
    %v442 = vrot.slane %v441, 1
    %v443 = vadd.f32 %v441, %v442
    %v444 = vsel %vm49, %v436, 0.0
    %v445 = vrot.slane %v444, 4
    %v446 = vadd.f32 %v444, %v445
    %v447 = vrot.slane %v446, 2
    %v448 = vadd.f32 %v446, %v447
    %v449 = vrot.slane %v448, 1
    %v450 = vadd.f32 %v448, %v449
    %vm453 = vcmask 1041409
    %v454 = vsel %vm453, %v450, %v443
    %vm456 = vcmask 25600
    %457 = vst.msk [vmem:[#allocation3] sm:$0x3] %vm456, %v454
    // Predicated region
    $region42: #{tpu_custom_call.1} parent=1 // pred_check
      _
    $region43: #{tpu_custom_call.1} parent=1 // pred_check_branch
      %459 = sbr.rel (0) target = $region45
    $region44: #{tpu_custom_call.1} parent=1 // pred_region
      %s461 = ssub.s32 32, 32
      %462 = vsyncadd [#allocation4], %s461
      %s464 = sshll.u32 [#allocation3], 4
      %s465 = int_to_ptr.vmem [resolvable:$true] %s464
      %467 = dma.vmem_to_hbm [thread:$0]  %s465, 32, %s10, [#allocation4]
    $region45: #{tpu_custom_call.1} parent=1 // pred_fallthru
      _
    // Predicated region
    $region46: #{tpu_custom_call.1} parent=1 // pred_check
      _
    $region47: #{tpu_custom_call.1} parent=1 // pred_check_branch
      %469 = sbr.rel (0) target = $region49
    $region48: #{tpu_custom_call.1} parent=1 // pred_region
      %470 = dma.done [#allocation4], 32
    $region49: #{tpu_custom_call.1} parent=1 // pred_fallthru
      _
    %471 = vsyncpa [#allocation4], 1

</llo_original>
